<compile_context>
chip_gen: v6e
topology: v6e:2x2x1
jax: 0.10.0
libtpu: 0.0.40
codegen_flags: <defaults>
</compile_context>

<pallas_src>
import jax
import jax.numpy as jnp
from jax.experimental import pallas as pl
from jax.experimental.pallas import tpu as pltpu


_TARGET_BLOCK_BYTES = 8 << 20      # ~8 MiB output block: near HBM roofline, amortizes per-step cost
_SPLIT_THRESHOLD_BYTES = 2 << 20   # levels >= 2 MiB keep >=2 row tiles (v7x 2-TC sharding)
_VMEM_LIMIT_FLOOR = 32 << 20       # never request below v6e/v7x scoped default; raises v5e's 16 MiB
_VMEM_LIMIT_CEIL = 48 << 20        # stay comfortably under v7x's 64 MiB physical VMEM
_MIN_PALLAS_BYTES = 256 * 1024     # levels smaller than this skip Pallas launch overhead (plain JAX)


def _round_up(v, m):
    return -(-v // m) * m


# ----------------------------------------------------------------------------
# Pallas kernel: per-pixel anchor slab for one feature map level
# ----------------------------------------------------------------------------
def _anchor_grid_kernel(const_ref, yrow_ref, out_ref):
    """Output block: (tile_h, L) with L = grid_w * A * 4.

    Column c encodes (j, a, k) row-major (j = pixel col, a = anchor, k = coord):
        const[0, c] = (k even ? j*stride_w : 0) + base[a, k]      (col_base)
        const[1, c] = (k odd  ? 1 : 0)                            (y selector)
        yrow[i, 0]  = i * stride_h
        out[i, c]   = const[0, c] + const[1, c] * yrow[i, 0]
    Exactly reproduces shift_x/shift_y + base with (x, y, x, y) ordering.
    Two VPU ops per element; hides entirely under the output DMA.
    """
    c = const_ref[...]                                   # (2, L)
    out_ref[...] = c[0:1, :] + c[1:2, :] * yrow_ref[...]  # (1,L) + (1,L)*(tile_h,1)


def _choose_tile_h(grid_h, lane_width):
    """Row tile: ~8 MiB blocks, multiple of 8; >=2 tiles for multi-MiB levels."""
    bytes_per_row = lane_width * 4
    level_bytes = grid_h * bytes_per_row
    rows = max(8, (_TARGET_BLOCK_BYTES // bytes_per_row) // 8 * 8)
    if level_bytes >= _SPLIT_THRESHOLD_BYTES and grid_h > 8:
        # Keep at least two grid steps so ("parallel",) can shard the row grid
        # across v7x's 2 TensorCores.  Costs one extra ~0.35us step on 1-TC
        # chips (negligible for a multi-MiB level).
        rows = min(rows, _round_up(-(-grid_h // 2), 8))
    if rows >= grid_h:
        return grid_h                      # single block covers the level
    return rows


def grid_anchors_pallas(base_anchors, grid_h, grid_w, stride_h, stride_w):
    """Anchors for one feature map: returns (grid_h*grid_w*A, 4) float32."""
    base = jnp.asarray(base_anchors, jnp.float32)        # (A, 4)
    A = base.shape[0]
    L = grid_w * A * 4                                    # lane-dense output width

    # Per-column constants, merged into ONE (2, L) operand -> single input DMA
    # and single VMEM buffer (shorter pipeline prologue than two (1, L) inputs).
    xmask = jnp.asarray([1.0, 0.0, 1.0, 0.0], jnp.float32)             # x-coord selector
    sx = jnp.arange(grid_w, dtype=jnp.float32) * jnp.float32(stride_w)
    col_base = (sx[:, None, None] * xmask[None, None, :]
                + base[None, :, :]).reshape(L)
    col_ysel = jnp.broadcast_to(1.0 - xmask, (grid_w, A, 4)).reshape(L)
    const = jnp.stack([col_base, col_ysel], axis=0)                    # (2, L)

    tile_h = _choose_tile_h(grid_h, L)
    num_tiles = pl.cdiv(grid_h, tile_h)
    rows_padded = num_tiles * tile_h

    # Precomputed per-row y shift (i * stride_h): replaces the in-kernel
    # broadcasted_iota + int32->f32 convert.  Padded so every block is full.
    yrow = (jnp.arange(rows_padded, dtype=jnp.float32)
            * jnp.float32(stride_h))[:, None]                          # (rows_padded, 1)

    tile_bytes = tile_h * L * 4
    vmem_need = 2 * tile_bytes + 2 * int(const.size) * 4 + 2 * rows_padded * 4 + (2 << 20)
    vmem_limit = int(min(max(vmem_need, _VMEM_LIMIT_FLOOR), _VMEM_LIMIT_CEIL))

    out = pl.pallas_call(
        _anchor_grid_kernel,
        out_shape=jax.ShapeDtypeStruct((grid_h, L), jnp.float32),
        grid=(num_tiles,),
        in_specs=[
            pl.BlockSpec((2, L), lambda r: (0, 0)),        # constant block: fetched once
            pl.BlockSpec((tile_h, 1), lambda r: (r, 0)),   # per-row y shift
        ],
        out_specs=pl.BlockSpec((tile_h, L), lambda r: (r, 0)),
        compiler_params=pltpu.CompilerParams(
            dimension_semantics=("parallel",),
            vmem_limit_bytes=vmem_limit,
        ),
        cost_estimate=pl.CostEstimate(
            flops=2 * grid_h * L,
            transcendentals=0,
            bytes_accessed=grid_h * L * 4 + int(const.size) * 4 + rows_padded * 4,
        ),
    )(const, yrow)

    # Row-major (gh, gw, A, 4) memory -> free view as (gh*gw*A, 4).
    return out.reshape(grid_h * grid_w * A, 4)


# ----------------------------------------------------------------------------
# Plain-JAX path (tiny levels + numerical reference)
# ----------------------------------------------------------------------------
def grid_anchors_jax(base_anchors, grid_h, grid_w, stride_h, stride_w):
    base = jnp.asarray(base_anchors, jnp.float32)
    sx = jnp.arange(grid_w, dtype=jnp.float32) * jnp.float32(stride_w)
    sy = jnp.arange(grid_h, dtype=jnp.float32) * jnp.float32(stride_h)
    yy, xx = jnp.meshgrid(sy, sx, indexing="ij")
    xr = xx.reshape(-1)
    yr = yy.reshape(-1)
    shifts = jnp.stack([xr, yr, xr, yr], axis=1)
    return (shifts[:, None, :] + base[None, :, :]).reshape(-1, 4)


# ----------------------------------------------------------------------------
# Glue (plain JAX): base cell anchors + the module wrapper
# ----------------------------------------------------------------------------
def generate_cell_anchors(scales, aspect_ratios):
    scales = jnp.asarray(scales, jnp.float32)
    ars = jnp.asarray(aspect_ratios, jnp.float32)
    h_ratios = jnp.sqrt(ars)
    w_ratios = 1.0 / h_ratios
    ws = (w_ratios[:, None] * scales[None, :]).reshape(-1)
    hs = (h_ratios[:, None] * scales[None, :]).reshape(-1)
    base = jnp.stack([-ws, -hs, ws, hs], axis=1) / 2.0
    return jnp.round(base)   # round-half-to-even, same as torch.round


class AnchorGeneratorPallas:
    """JAX/Pallas port of the PyTorch AnchorGenerator forward pass."""

    def __init__(self, sizes=((128, 256, 512),), aspect_ratios=((0.5, 1.0, 2.0),),
                 min_pallas_bytes=_MIN_PALLAS_BYTES):
        self.sizes = sizes
        self.aspect_ratios = aspect_ratios
        self.min_pallas_bytes = min_pallas_bytes
        self.cell_anchors = [
            generate_cell_anchors(s, a) for s, a in zip(sizes, aspect_ratios)
        ]
        # TODO(synk): the PyTorch _cache dict is Python-level memoization of
        # identical grid sizes; omitted (pure function, no state needed).

    def __call__(self, inputs, feature_maps):
        # layout: inputs (N, C, H, W), feature_maps list of (N, C, h, w) — NCHW.
        image_h, image_w = inputs.shape[-2:]
        assert len(feature_maps) == len(self.cell_anchors)

        # TODO(synk): fusing ALL levels into one pallas_call (scalar-prefetched
        # per-level offsets + manual DMA to a flat pl.ANY output) is omitted
        # because levels have heterogeneous lane widths (grid_w*A*4); instead,
        # sub-256KiB levels are hoisted to plain JAX (XLA fuses them) so only
        # large levels pay a Pallas launch.
        anchors_over_fmaps = []
        for fmap, base in zip(feature_maps, self.cell_anchors):
            gh, gw = fmap.shape[-2:]
            sh = image_h // gh
            sw = image_w // gw
            A = base.shape[0]
            level_bytes = gh * gw * A * 4 * 4
            if level_bytes < self.min_pallas_bytes:
                anchors_over_fmaps.append(grid_anchors_jax(base, gh, gw, sh, sw))
            else:
                anchors_over_fmaps.append(grid_anchors_pallas(base, gh, gw, sh, sw))

        per_image = jnp.concatenate(anchors_over_fmaps, axis=0)
        # Same anchor tensor per image (PyTorch returns one tensor per image).
        return [per_image for _ in range(inputs.shape[0])]


if __name__ == "__main__":
    key = jax.random.PRNGKey(0)
    k1, k2, k3 = jax.random.split(key, 3)

    # Two-level config, image 256x256 (NCHW):
    #   level 0: 64x64 feature map (stride 4)  -> goes through the Pallas kernel
    #   level 1: 16x16 feature map (stride 16) -> tiny, hoisted to plain JAX
    inputs = jax.random.normal(k1, (2, 3, 256, 256), dtype=jnp.float32)
    fmap0 = jax.random.normal(k2, (2, 4, 64, 64), dtype=jnp.float32)
    fmap1 = jax.random.normal(k3, (2, 4, 16, 16), dtype=jnp.float32)

    gen = AnchorGeneratorPallas(
        sizes=((32, 64, 128), (128, 256, 512)),
        aspect_ratios=((0.5, 1.0, 2.0), (0.5, 1.0, 2.0)),
    )
    anchors = gen(inputs, [fmap0, fmap1])
    anchors = [jax.block_until_ready(a) for a in anchors]

    n0 = 64 * 64 * 9
    n1 = 16 * 16 * 9
    assert len(anchors) == inputs.shape[0]
    assert anchors[0].shape == (n0 + n1, 4)
    assert anchors[0].dtype == jnp.float32

    # Numerical check: Pallas level against the pure-JAX reference, plus the
    # full concatenated per-image output.
    ref0 = grid_anchors_jax(gen.cell_anchors[0], 64, 64, 4, 4)
    ref1 = grid_anchors_jax(gen.cell_anchors[1], 16, 16, 16, 16)
    pallas_level0 = jax.block_until_ready(
        grid_anchors_pallas(gen.cell_anchors[0], 64, 64, 4, 4))
    assert jnp.allclose(pallas_level0, ref0), "pallas level mismatch vs reference"

    ref = jnp.concatenate([ref0, ref1], axis=0)
    assert jnp.allclose(anchors[0], ref), "mismatch vs reference"
    assert jnp.allclose(anchors[1], ref), "mismatch vs reference"

    print("KERNEL_OK")
</pallas_src>

<mosaic_0001>
module attributes {stable_mosaic.version = 11 : i64} {
  func.func @_anchor_grid_kernel(%arg0: i32, %arg1: memref<2x2304xf32, #tpu.memory_space<vmem>>, %arg2: memref<64x1xf32, #tpu.memory_space<vmem>>, %arg3: memref<64x2304xf32, #tpu.memory_space<vmem>>) attributes {dimension_semantics = [#tpu.dimension_semantics<parallel>], iteration_bounds = array<i64: 1>, scalar_prefetch = 0 : i64, scratch_operands = 0 : i64, tpu.core_type = #tpu.core_type<tc>, window_params = [{pipeline_mode = #tpu.pipeline_mode<synchronous>, transform_indices = @transform_0, window_bounds = array<i64: 2, 2304>}, {transform_indices = @transform_1, window_bounds = array<i64: 64, 1>}, {transform_indices = @transform_2, window_bounds = array<i64: 64, 2304>}]} {
    %c0 = arith.constant 0 : index
    %c0_0 = arith.constant 0 : index
    %0 = vector.load %arg1[%c0, %c0_0] : memref<2x2304xf32, #tpu.memory_space<vmem>>, vector<2x2304xf32>
    %1 = vector.extract_strided_slice %0 {offsets = [0, 0], sizes = [1, 2304], strides = [1, 1]} : vector<2x2304xf32> to vector<1x2304xf32>
    %2 = vector.extract_strided_slice %0 {offsets = [1, 0], sizes = [1, 2304], strides = [1, 1]} : vector<2x2304xf32> to vector<1x2304xf32>
    %c0_1 = arith.constant 0 : index
    %c0_2 = arith.constant 0 : index
    %3 = vector.load %arg2[%c0_1, %c0_2] : memref<64x1xf32, #tpu.memory_space<vmem>>, vector<64x1xf32>
    %4 = vector.broadcast %2 : vector<1x2304xf32> to vector<64x2304xf32>
    %5 = vector.broadcast %3 : vector<64x1xf32> to vector<64x2304xf32>
    %6 = arith.mulf %4, %5 : vector<64x2304xf32>
    %7 = vector.broadcast %1 : vector<1x2304xf32> to vector<64x2304xf32>
    %8 = arith.addf %7, %6 : vector<64x2304xf32>
    %c0_3 = arith.constant 0 : index
    %c0_4 = arith.constant 0 : index
    %9 = vector.load %arg3[%c0_3, %c0_4] : memref<64x2304xf32, #tpu.memory_space<vmem>>, vector<64x2304xf32>
    tpu.vector_store %arg3[%c0_3, %c0_4], %8 {strides = array<i32>} : memref<64x2304xf32, #tpu.memory_space<vmem>>, vector<64x2304xf32>,
    return
  }
  func.func @transform_0(%arg0: i32) -> (i32, i32) {
    %c0_i32 = arith.constant 0 : i32
    %c0_i32_0 = arith.constant 0 : i32
    %c0_i32_1 = arith.constant 0 : i32
    return %c0_i32, %c0_i32_0 : i32, i32
  }
  func.func @transform_1(%arg0: i32) -> (i32, i32) {
    %c0_i32 = arith.constant 0 : i32
    %c0_i32_0 = arith.constant 0 : i32
    return %arg0, %c0_i32 : i32, i32
  }
  func.func @transform_2(%arg0: i32) -> (i32, i32) {
    %c0_i32 = arith.constant 0 : i32
    %c0_i32_0 = arith.constant 0 : i32
    return %arg0, %c0_i32 : i32, i32
  }
}

</mosaic_0001>

<llo_original>
// kernel: tpu_custom_call.1
$region0: #{tpu_custom_call.1}
  #allocation0 [shape = 'u32[]', space=smem, size = 0x4, offset = 0x4, fixed_abs, tag = 'smem constant byte address 0x4 - core index']
  #allocation1 [shape = 'u32[144,128]{1,0:T(1,128)}', space=vmem, size = 0x12000, scoped, tag = 'internal scratch']
  %s0 = inlined_call_operand.vmem [shape: f32[2,2304], index: 0, kind: input, shape index: {}]
  %s1 = inlined_call_operand.vmem [shape: f32[64,1], index: 1, kind: input, shape index: {}]
  %s2 = inlined_call_operand.hbm [shape: f32[64,2304], index: 2, kind: output, shape index: {}]
  %s3 = sld [smem:[#allocation0]]
  $region18: #{tpu_custom_call.1} parent=0
    _
  %s5 = ssub.s32 1, %s3
  %s6 = scalar_select 0, %s5, %s3
  $region1: #{tpu_custom_call.1} parent=0
    #allocation2 [shape = 'u8[589824]{0}', space=vmem, size = 0x90000, scoped, tag = 'output window, operand 0, single buffered']
    #allocation3 [shape = 's32[1]{0}', space=sflag, size = 0x4, scoped, tag = 'scoped memory for tpu_custom_call.1']
    %7 = vsyncpa [#allocation3], 0
    // Predicated region
    $region2: #{tpu_custom_call.1} parent=1 // pred_check
      _
    $region3: #{tpu_custom_call.1} parent=1 // pred_check_branch
      %9 = sbr.rel (0) target = $region5
    $region4: #{tpu_custom_call.1} parent=1 // pred_region
      _
    $region5: #{tpu_custom_call.1} parent=1 // pred_fallthru
      _
    // Predicated region
    $region6: #{tpu_custom_call.1} parent=1 // pred_check
      _
    $region7: #{tpu_custom_call.1} parent=1 // pred_check_branch
      %11 = sbr.rel (0) target = $region9
    $region8: #{tpu_custom_call.1} parent=1 // pred_region
      _
    $region9: #{tpu_custom_call.1} parent=1 // pred_fallthru
      _
    %v12 = vld [vmem:[%s0] sm:$0xff]
    %v13 = vld [vmem:[%s0 + $0x8] sm:$0xff]
    %v14 = vld [vmem:[%s0 + $0x10] sm:$0xff]
    %v15 = vld [vmem:[%s0 + $0x18] sm:$0xff]
    %v16 = vld [vmem:[%s0 + $0x20] sm:$0xf]
    %v17 = vld [vmem:[%s1] sm:$0xff]
    %v18 = vld [vmem:[%s1 + $0x8] sm:$0xff]
    %v19 = vld [vmem:[%s1 + $0x10] sm:$0xff]
    %v20 = vld [vmem:[%s1 + $0x18] sm:$0xff]
    %v21 = vld [vmem:[%s1 + $0x20] sm:$0xff]
    %v22 = vld [vmem:[%s1 + $0x28] sm:$0xff]
    %v23 = vld [vmem:[%s1 + $0x30] sm:$0xff]
    %v24 = vld [vmem:[%s1 + $0x38] sm:$0xff]
    %v30 = vlaneseq
    %v31 = vshrl.u32 %v30, 7
    %v32 = vsub.s32 1, %v31
    %v33 = vrot.slane %v12, %v32
    %v34 = vlaneseq
    %v35 = vshrl.u32 %v34, 7
    %v36 = vsub.s32 3, %v35
    %v37 = vrot.slane %v12, %v36
    %v38 = vlaneseq
    %v39 = vshrl.u32 %v38, 7
    %v40 = vsub.s32 5, %v39
    %v41 = vrot.slane %v12, %v40
    %v42 = vlaneseq
    %v43 = vshrl.u32 %v42, 7
    %v44 = vsub.s32 7, %v43
    %v45 = vrot.slane %v12, %v44
    %v46 = vlaneseq
    %v47 = vshrl.u32 %v46, 7
    %v48 = vsub.s32 1, %v47
    %v49 = vrot.slane %v13, %v48
    %v50 = vlaneseq
    %v51 = vshrl.u32 %v50, 7
    %v52 = vsub.s32 3, %v51
    %v53 = vrot.slane %v13, %v52
    %v54 = vlaneseq
    %v55 = vshrl.u32 %v54, 7
    %v56 = vsub.s32 5, %v55
    %v57 = vrot.slane %v13, %v56
    %v58 = vlaneseq
    %v59 = vshrl.u32 %v58, 7
    %v60 = vsub.s32 7, %v59
    %v61 = vrot.slane %v13, %v60
    %v62 = vlaneseq
    %v63 = vshrl.u32 %v62, 7
    %v64 = vsub.s32 1, %v63
    %v65 = vrot.slane %v14, %v64
    %v66 = vlaneseq
    %v67 = vshrl.u32 %v66, 7
    %v68 = vsub.s32 3, %v67
    %v69 = vrot.slane %v14, %v68
    %v70 = vlaneseq
    %v71 = vshrl.u32 %v70, 7
    %v72 = vsub.s32 5, %v71
    %v73 = vrot.slane %v14, %v72
    %v74 = vlaneseq
    %v75 = vshrl.u32 %v74, 7
    %v76 = vsub.s32 7, %v75
    %v77 = vrot.slane %v14, %v76
    %v78 = vlaneseq
    %v79 = vshrl.u32 %v78, 7
    %v80 = vsub.s32 1, %v79
    %v81 = vrot.slane %v15, %v80
    %v82 = vlaneseq
    %v83 = vshrl.u32 %v82, 7
    %v84 = vsub.s32 3, %v83
    %v85 = vrot.slane %v15, %v84
    %v86 = vlaneseq
    %v87 = vshrl.u32 %v86, 7
    %v88 = vsub.s32 5, %v87
    %v89 = vrot.slane %v15, %v88
    %v90 = vlaneseq
    %v91 = vshrl.u32 %v90, 7
    %v92 = vsub.s32 7, %v91
    %v93 = vrot.slane %v15, %v92
    %v94 = vlaneseq
    %v95 = vshrl.u32 %v94, 7
    %v96 = vsub.s32 1, %v95
    %v97 = vrot.slane %v16, %v96
    %v98 = vlaneseq
    %v99 = vshrl.u32 %v98, 7
    %v100 = vsub.s32 3, %v99
    %v101 = vrot.slane %v16, %v100
    %v120 = vlaneseq
    %v121 = vshrl.u32 %v120, 7
    %v122 = vsub.s32 1, %v121
    %v123 = vrot.slane %v33, %v122
    %v124 = vlaneseq
    %v125 = vshrl.u32 %v124, 7
    %v126 = vsub.s32 1, %v125
    %v127 = vrot.slane %v37, %v126
    %v128 = vlaneseq
    %v129 = vshrl.u32 %v128, 7
    %v130 = vsub.s32 1, %v129
    %v131 = vrot.slane %v41, %v130
    %v132 = vlaneseq
    %v133 = vshrl.u32 %v132, 7
    %v134 = vsub.s32 1, %v133
    %v135 = vrot.slane %v45, %v134
    %v136 = vlaneseq
    %v137 = vshrl.u32 %v136, 7
    %v138 = vsub.s32 1, %v137
    %v139 = vrot.slane %v49, %v138
    %v140 = vlaneseq
    %v141 = vshrl.u32 %v140, 7
    %v142 = vsub.s32 1, %v141
    %v143 = vrot.slane %v53, %v142
    %v144 = vlaneseq
    %v145 = vshrl.u32 %v144, 7
    %v146 = vsub.s32 1, %v145
    %v147 = vrot.slane %v57, %v146
    %v148 = vlaneseq
    %v149 = vshrl.u32 %v148, 7
    %v150 = vsub.s32 1, %v149
    %v151 = vrot.slane %v61, %v150
    %v152 = vlaneseq
    %v153 = vshrl.u32 %v152, 7
    %v154 = vsub.s32 1, %v153
    %v155 = vrot.slane %v65, %v154
    %v156 = vlaneseq
    %v157 = vshrl.u32 %v156, 7
    %v158 = vsub.s32 1, %v157
    %v159 = vrot.slane %v69, %v158
    %v160 = vlaneseq
    %v161 = vshrl.u32 %v160, 7
    %v162 = vsub.s32 1, %v161
    %v163 = vrot.slane %v73, %v162
    %v164 = vlaneseq
    %v165 = vshrl.u32 %v164, 7
    %v166 = vsub.s32 1, %v165
    %v167 = vrot.slane %v77, %v166
    %v168 = vlaneseq
    %v169 = vshrl.u32 %v168, 7
    %v170 = vsub.s32 1, %v169
    %v171 = vrot.slane %v81, %v170
    %v172 = vlaneseq
    %v173 = vshrl.u32 %v172, 7
    %v174 = vsub.s32 1, %v173
    %v175 = vrot.slane %v85, %v174
    %v176 = vlaneseq
    %v177 = vshrl.u32 %v176, 7
    %v178 = vsub.s32 1, %v177
    %v179 = vrot.slane %v89, %v178
    %v180 = vlaneseq
    %v181 = vshrl.u32 %v180, 7
    %v182 = vsub.s32 1, %v181
    %v183 = vrot.slane %v93, %v182
    %v184 = vlaneseq
    %v185 = vshrl.u32 %v184, 7
    %v186 = vsub.s32 1, %v185
    %v187 = vrot.slane %v97, %v186
    %v188 = vlaneseq
    %v189 = vshrl.u32 %v188, 7
    %v190 = vsub.s32 1, %v189
    %v191 = vrot.slane %v101, %v190
    %193 = vset.pattern.permute.xlu0 0
    %194 = vperm.xlu0 %193, %v17
    %v195 = vpop.permute.xlu0 %194
    %198 = vset.pattern.permute.xlu0 0
    %199 = vperm.xlu0 %198, %v18
    %v200 = vpop.permute.xlu0 %199
    %203 = vset.pattern.permute.xlu0 0
    %204 = vperm.xlu0 %203, %v19
    %v205 = vpop.permute.xlu0 %204
    %208 = vset.pattern.permute.xlu0 0
    %209 = vperm.xlu0 %208, %v20
    %v210 = vpop.permute.xlu0 %209
    %213 = vset.pattern.permute.xlu0 0
    %214 = vperm.xlu0 %213, %v21
    %v215 = vpop.permute.xlu0 %214
    %218 = vset.pattern.permute.xlu0 0
    %219 = vperm.xlu0 %218, %v22
    %v220 = vpop.permute.xlu0 %219
    %223 = vset.pattern.permute.xlu0 0
    %224 = vperm.xlu0 %223, %v23
    %v225 = vpop.permute.xlu0 %224
    %228 = vset.pattern.permute.xlu0 0
    %229 = vperm.xlu0 %228, %v24
    %v230 = vpop.permute.xlu0 %229
    %v232 = vmul.f32 %v123, %v195
    %v233 = vmul.f32 %v127, %v195
    %v234 = vmul.f32 %v131, %v195
    %v235 = vmul.f32 %v135, %v195
    %v236 = vmul.f32 %v139, %v195
    %v237 = vmul.f32 %v143, %v195
    %v238 = vmul.f32 %v147, %v195
    %v239 = vmul.f32 %v151, %v195
    %v240 = vmul.f32 %v155, %v195
    %v241 = vmul.f32 %v159, %v195
    %v242 = vmul.f32 %v163, %v195
    %v243 = vmul.f32 %v167, %v195
    %v244 = vmul.f32 %v171, %v195
    %v245 = vmul.f32 %v175, %v195
    %v246 = vmul.f32 %v179, %v195
    %v247 = vmul.f32 %v183, %v195
    %v248 = vmul.f32 %v187, %v195
    %v249 = vmul.f32 %v191, %v195
    %v250 = vmul.f32 %v123, %v200
    %v251 = vmul.f32 %v127, %v200
    %v252 = vmul.f32 %v131, %v200
    %v253 = vmul.f32 %v135, %v200
    %v254 = vmul.f32 %v139, %v200
    %v255 = vmul.f32 %v143, %v200
    %v256 = vmul.f32 %v147, %v200
    %v257 = vmul.f32 %v151, %v200
    %v258 = vmul.f32 %v155, %v200
    %v259 = vmul.f32 %v159, %v200
    %v260 = vmul.f32 %v163, %v200
    %v261 = vmul.f32 %v167, %v200
    %v262 = vmul.f32 %v171, %v200
    %v263 = vmul.f32 %v175, %v200
    %v264 = vmul.f32 %v179, %v200
    %v265 = vmul.f32 %v183, %v200
    %v266 = vmul.f32 %v187, %v200
    %v267 = vmul.f32 %v191, %v200
    %v268 = vmul.f32 %v123, %v205
    %v269 = vmul.f32 %v127, %v205
    %v270 = vmul.f32 %v131, %v205
    %v271 = vmul.f32 %v135, %v205
    %v272 = vmul.f32 %v139, %v205
    %v273 = vmul.f32 %v143, %v205
    %v274 = vmul.f32 %v147, %v205
    %v275 = vmul.f32 %v151, %v205
    %v276 = vmul.f32 %v155, %v205
    %v277 = vmul.f32 %v159, %v205
    %v278 = vmul.f32 %v163, %v205
    %v279 = vmul.f32 %v167, %v205
    %v280 = vmul.f32 %v171, %v205
    %v281 = vmul.f32 %v175, %v205
    %v282 = vmul.f32 %v179, %v205
    %v283 = vmul.f32 %v183, %v205
    %v284 = vmul.f32 %v187, %v205
    %v285 = vmul.f32 %v191, %v205
    %v286 = vmul.f32 %v123, %v210
    %v287 = vmul.f32 %v127, %v210
    %v288 = vmul.f32 %v131, %v210
    %v289 = vmul.f32 %v135, %v210
    %v290 = vmul.f32 %v139, %v210
    %v291 = vmul.f32 %v143, %v210
    %v292 = vmul.f32 %v147, %v210
    %v293 = vmul.f32 %v151, %v210
    %v294 = vmul.f32 %v155, %v210
    %v295 = vmul.f32 %v159, %v210
    %v296 = vmul.f32 %v163, %v210
    %v297 = vmul.f32 %v167, %v210
    %v298 = vmul.f32 %v171, %v210
    %v299 = vmul.f32 %v175, %v210
    %v300 = vmul.f32 %v179, %v210
    %v301 = vmul.f32 %v183, %v210
    %v302 = vmul.f32 %v187, %v210
    %v303 = vmul.f32 %v191, %v210
    %v304 = vmul.f32 %v123, %v215
    %v305 = vmul.f32 %v127, %v215
    %v306 = vmul.f32 %v131, %v215
    %v307 = vmul.f32 %v135, %v215
    %v308 = vmul.f32 %v139, %v215
    %v309 = vmul.f32 %v143, %v215
    %v310 = vmul.f32 %v147, %v215
    %v311 = vmul.f32 %v151, %v215
    %v312 = vmul.f32 %v155, %v215
    %v313 = vmul.f32 %v159, %v215
    %v314 = vmul.f32 %v163, %v215
    %v315 = vmul.f32 %v167, %v215
    %v316 = vmul.f32 %v171, %v215
    %v317 = vmul.f32 %v175, %v215
    %v318 = vmul.f32 %v179, %v215
    %v319 = vmul.f32 %v183, %v215
    %v320 = vmul.f32 %v187, %v215
    %v321 = vmul.f32 %v191, %v215
    %v322 = vmul.f32 %v123, %v220
    %v323 = vmul.f32 %v127, %v220
    %v324 = vmul.f32 %v131, %v220
    %v325 = vmul.f32 %v135, %v220
    %v326 = vmul.f32 %v139, %v220
    %v327 = vmul.f32 %v143, %v220
    %v328 = vmul.f32 %v147, %v220
    %v329 = vmul.f32 %v151, %v220
    %v330 = vmul.f32 %v155, %v220
    %v331 = vmul.f32 %v159, %v220
    %v332 = vmul.f32 %v163, %v220
    %v333 = vmul.f32 %v167, %v220
    %v334 = vmul.f32 %v171, %v220
    %v335 = vmul.f32 %v175, %v220
    %v336 = vmul.f32 %v179, %v220
    %v337 = vmul.f32 %v183, %v220
    %v338 = vmul.f32 %v187, %v220
    %v339 = vmul.f32 %v191, %v220
    %v340 = vmul.f32 %v123, %v225
    %v341 = vmul.f32 %v127, %v225
    %v342 = vmul.f32 %v131, %v225
    %v343 = vmul.f32 %v135, %v225
    %v344 = vmul.f32 %v139, %v225
    %v345 = vmul.f32 %v143, %v225
    %v346 = vmul.f32 %v147, %v225
    %v347 = vmul.f32 %v151, %v225
    %v348 = vmul.f32 %v155, %v225
    %v349 = vmul.f32 %v159, %v225
    %v350 = vmul.f32 %v163, %v225
    %v351 = vmul.f32 %v167, %v225
    %v352 = vmul.f32 %v171, %v225
    %v353 = vmul.f32 %v175, %v225
    %v354 = vmul.f32 %v179, %v225
    %v355 = vmul.f32 %v183, %v225
    %v356 = vmul.f32 %v187, %v225
    %v357 = vmul.f32 %v191, %v225
    %v358 = vmul.f32 %v123, %v230
    %v359 = vmul.f32 %v127, %v230
    %v360 = vmul.f32 %v131, %v230
    %v361 = vmul.f32 %v135, %v230
    %v362 = vmul.f32 %v139, %v230
    %v363 = vmul.f32 %v143, %v230
    %v364 = vmul.f32 %v147, %v230
    %v365 = vmul.f32 %v151, %v230
    %v366 = vmul.f32 %v155, %v230
    %v367 = vmul.f32 %v159, %v230
    %v368 = vmul.f32 %v163, %v230
    %v369 = vmul.f32 %v167, %v230
    %v370 = vmul.f32 %v171, %v230
    %v371 = vmul.f32 %v175, %v230
    %v372 = vmul.f32 %v179, %v230
    %v373 = vmul.f32 %v183, %v230
    %v374 = vmul.f32 %v187, %v230
    %v375 = vmul.f32 %v191, %v230
    %v376 = vlaneseq
    %v377 = vshrl.u32 %v376, 7
    %v378 = vsub.s32 0, %v377
    %v379 = vrot.slane %v12, %v378
    %v380 = vlaneseq
    %v381 = vshrl.u32 %v380, 7
    %v382 = vsub.s32 2, %v381
    %v383 = vrot.slane %v12, %v382
    %v384 = vlaneseq
    %v385 = vshrl.u32 %v384, 7
    %v386 = vsub.s32 4, %v385
    %v387 = vrot.slane %v12, %v386
    %v388 = vlaneseq
    %v389 = vshrl.u32 %v388, 7
    %v390 = vsub.s32 6, %v389
    %v391 = vrot.slane %v12, %v390
    %v392 = vlaneseq
    %v393 = vshrl.u32 %v392, 7
    %v394 = vsub.s32 0, %v393
    %v395 = vrot.slane %v13, %v394
    %v396 = vlaneseq
    %v397 = vshrl.u32 %v396, 7
    %v398 = vsub.s32 2, %v397
    %v399 = vrot.slane %v13, %v398
    %v400 = vlaneseq
    %v401 = vshrl.u32 %v400, 7
    %v402 = vsub.s32 4, %v401
    %v403 = vrot.slane %v13, %v402
    %v404 = vlaneseq
    %v405 = vshrl.u32 %v404, 7
    %v406 = vsub.s32 6, %v405
    %v407 = vrot.slane %v13, %v406
    %v408 = vlaneseq
    %v409 = vshrl.u32 %v408, 7
    %v410 = vsub.s32 0, %v409
    %v411 = vrot.slane %v14, %v410
    %v412 = vlaneseq
    %v413 = vshrl.u32 %v412, 7
    %v414 = vsub.s32 2, %v413
    %v415 = vrot.slane %v14, %v414
    %v416 = vlaneseq
    %v417 = vshrl.u32 %v416, 7
    %v418 = vsub.s32 4, %v417
    %v419 = vrot.slane %v14, %v418
    %v420 = vlaneseq
    %v421 = vshrl.u32 %v420, 7
    %v422 = vsub.s32 6, %v421
    %v423 = vrot.slane %v14, %v422
    %v424 = vlaneseq
    %v425 = vshrl.u32 %v424, 7
    %v426 = vsub.s32 0, %v425
    %v427 = vrot.slane %v15, %v426
    %v428 = vlaneseq
    %v429 = vshrl.u32 %v428, 7
    %v430 = vsub.s32 2, %v429
    %v431 = vrot.slane %v15, %v430
    %v432 = vlaneseq
    %v433 = vshrl.u32 %v432, 7
    %v434 = vsub.s32 4, %v433
    %v435 = vrot.slane %v15, %v434
    %v436 = vlaneseq
    %v437 = vshrl.u32 %v436, 7
    %v438 = vsub.s32 6, %v437
    %v439 = vrot.slane %v15, %v438
    %v440 = vlaneseq
    %v441 = vshrl.u32 %v440, 7
    %v442 = vsub.s32 0, %v441
    %v443 = vrot.slane %v16, %v442
    %v444 = vlaneseq
    %v445 = vshrl.u32 %v444, 7
    %v446 = vsub.s32 2, %v445
    %v447 = vrot.slane %v16, %v446
    %v466 = vlaneseq
    %v467 = vshrl.u32 %v466, 7
    %v468 = vsub.s32 0, %v467
    %v469 = vrot.slane %v379, %v468
    %v470 = vlaneseq
    %v471 = vshrl.u32 %v470, 7
    %v472 = vsub.s32 0, %v471
    %v473 = vrot.slane %v383, %v472
    %v474 = vlaneseq
    %v475 = vshrl.u32 %v474, 7
    %v476 = vsub.s32 0, %v475
    %v477 = vrot.slane %v387, %v476
    %v478 = vlaneseq
    %v479 = vshrl.u32 %v478, 7
    %v480 = vsub.s32 0, %v479
    %v481 = vrot.slane %v391, %v480
    %v482 = vlaneseq
    %v483 = vshrl.u32 %v482, 7
    %v484 = vsub.s32 0, %v483
    %v485 = vrot.slane %v395, %v484
    %v486 = vlaneseq
    %v487 = vshrl.u32 %v486, 7
    %v488 = vsub.s32 0, %v487
    %v489 = vrot.slane %v399, %v488
    %v490 = vlaneseq
    %v491 = vshrl.u32 %v490, 7
    %v492 = vsub.s32 0, %v491
    %v493 = vrot.slane %v403, %v492
    %v494 = vlaneseq
    %v495 = vshrl.u32 %v494, 7
    %v496 = vsub.s32 0, %v495
    %v497 = vrot.slane %v407, %v496
    %v498 = vlaneseq
    %v499 = vshrl.u32 %v498, 7
    %v500 = vsub.s32 0, %v499
    %v501 = vrot.slane %v411, %v500
    %v502 = vlaneseq
    %v503 = vshrl.u32 %v502, 7
    %v504 = vsub.s32 0, %v503
    %v505 = vrot.slane %v415, %v504
    %v506 = vlaneseq
    %v507 = vshrl.u32 %v506, 7
    %v508 = vsub.s32 0, %v507
    %v509 = vrot.slane %v419, %v508
    %v510 = vlaneseq
    %v511 = vshrl.u32 %v510, 7
    %v512 = vsub.s32 0, %v511
    %v513 = vrot.slane %v423, %v512
    %v514 = vlaneseq
    %v515 = vshrl.u32 %v514, 7
    %v516 = vsub.s32 0, %v515
    %v517 = vrot.slane %v427, %v516
    %v518 = vlaneseq
    %v519 = vshrl.u32 %v518, 7
    %v520 = vsub.s32 0, %v519
    %v521 = vrot.slane %v431, %v520
    %v522 = vlaneseq
    %v523 = vshrl.u32 %v522, 7
    %v524 = vsub.s32 0, %v523
    %v525 = vrot.slane %v435, %v524
    %v526 = vlaneseq
    %v527 = vshrl.u32 %v526, 7
    %v528 = vsub.s32 0, %v527
    %v529 = vrot.slane %v439, %v528
    %v530 = vlaneseq
    %v531 = vshrl.u32 %v530, 7
    %v532 = vsub.s32 0, %v531
    %v533 = vrot.slane %v443, %v532
    %v534 = vlaneseq
    %v535 = vshrl.u32 %v534, 7
    %v536 = vsub.s32 0, %v535
    %v537 = vrot.slane %v447, %v536
    %v538 = vadd.f32 %v469, %v232
    %v539 = vadd.f32 %v473, %v233
    %v540 = vadd.f32 %v477, %v234
    %v541 = vadd.f32 %v481, %v235
    %v542 = vadd.f32 %v485, %v236
    %v543 = vadd.f32 %v489, %v237
    %v544 = vadd.f32 %v493, %v238
    %v545 = vadd.f32 %v497, %v239
    %v546 = vadd.f32 %v501, %v240
    %v547 = vadd.f32 %v505, %v241
    %v548 = vadd.f32 %v509, %v242
    %v549 = vadd.f32 %v513, %v243
    %v550 = vadd.f32 %v517, %v244
    %v551 = vadd.f32 %v521, %v245
    %v552 = vadd.f32 %v525, %v246
    %v553 = vadd.f32 %v529, %v247
    %v554 = vadd.f32 %v533, %v248
    %v555 = vadd.f32 %v537, %v249
    %v556 = vadd.f32 %v469, %v250
    %v557 = vadd.f32 %v473, %v251
    %v558 = vadd.f32 %v477, %v252
    %v559 = vadd.f32 %v481, %v253
    %v560 = vadd.f32 %v485, %v254
    %v561 = vadd.f32 %v489, %v255
    %v562 = vadd.f32 %v493, %v256
    %v563 = vadd.f32 %v497, %v257
    %v564 = vadd.f32 %v501, %v258
    %v565 = vadd.f32 %v505, %v259
    %v566 = vadd.f32 %v509, %v260
    %v567 = vadd.f32 %v513, %v261
    %v568 = vadd.f32 %v517, %v262
    %v569 = vadd.f32 %v521, %v263
    %v570 = vadd.f32 %v525, %v264
    %v571 = vadd.f32 %v529, %v265
    %v572 = vadd.f32 %v533, %v266
    %v573 = vadd.f32 %v537, %v267
    %v574 = vadd.f32 %v469, %v268
    %v575 = vadd.f32 %v473, %v269
    %v576 = vadd.f32 %v477, %v270
    %v577 = vadd.f32 %v481, %v271
    %v578 = vadd.f32 %v485, %v272
    %v579 = vadd.f32 %v489, %v273
    %v580 = vadd.f32 %v493, %v274
    %v581 = vadd.f32 %v497, %v275
    %v582 = vadd.f32 %v501, %v276
    %v583 = vadd.f32 %v505, %v277
    %v584 = vadd.f32 %v509, %v278
    %v585 = vadd.f32 %v513, %v279
    %v586 = vadd.f32 %v517, %v280
    %v587 = vadd.f32 %v521, %v281
    %v588 = vadd.f32 %v525, %v282
    %v589 = vadd.f32 %v529, %v283
    %v590 = vadd.f32 %v533, %v284
    %v591 = vadd.f32 %v537, %v285
    %v592 = vadd.f32 %v469, %v286
    %v593 = vadd.f32 %v473, %v287
    %v594 = vadd.f32 %v477, %v288
    %v595 = vadd.f32 %v481, %v289
    %v596 = vadd.f32 %v485, %v290
    %v597 = vadd.f32 %v489, %v291
    %v598 = vadd.f32 %v493, %v292
    %v599 = vadd.f32 %v497, %v293
    %v600 = vadd.f32 %v501, %v294
    %v601 = vadd.f32 %v505, %v295
    %v602 = vadd.f32 %v509, %v296
    %v603 = vadd.f32 %v513, %v297
    %v604 = vadd.f32 %v517, %v298
    %v605 = vadd.f32 %v521, %v299
    %v606 = vadd.f32 %v525, %v300
    %v607 = vadd.f32 %v529, %v301
    %v608 = vadd.f32 %v533, %v302
    %v609 = vadd.f32 %v537, %v303
    %v610 = vadd.f32 %v469, %v304
    %v611 = vadd.f32 %v473, %v305
    %v612 = vadd.f32 %v477, %v306
    %v613 = vadd.f32 %v481, %v307
    %v614 = vadd.f32 %v485, %v308
    %v615 = vadd.f32 %v489, %v309
    %v616 = vadd.f32 %v493, %v310
    %v617 = vadd.f32 %v497, %v311
    %v618 = vadd.f32 %v501, %v312
    %v619 = vadd.f32 %v505, %v313
    %v620 = vadd.f32 %v509, %v314
    %v621 = vadd.f32 %v513, %v315
    %v622 = vadd.f32 %v517, %v316
    %v623 = vadd.f32 %v521, %v317
    %v624 = vadd.f32 %v525, %v318
    %v625 = vadd.f32 %v529, %v319
    %v626 = vadd.f32 %v533, %v320
    %v627 = vadd.f32 %v537, %v321
    %v628 = vadd.f32 %v469, %v322
    %v629 = vadd.f32 %v473, %v323
    %v630 = vadd.f32 %v477, %v324
    %v631 = vadd.f32 %v481, %v325
    %v632 = vadd.f32 %v485, %v326
    %v633 = vadd.f32 %v489, %v327
    %v634 = vadd.f32 %v493, %v328
    %v635 = vadd.f32 %v497, %v329
    %v636 = vadd.f32 %v501, %v330
    %v637 = vadd.f32 %v505, %v331
    %v638 = vadd.f32 %v509, %v332
    %v639 = vadd.f32 %v513, %v333
    %v640 = vadd.f32 %v517, %v334
    %v641 = vadd.f32 %v521, %v335
    %v642 = vadd.f32 %v525, %v336
    %v643 = vadd.f32 %v529, %v337
    %v644 = vadd.f32 %v533, %v338
    %v645 = vadd.f32 %v537, %v339
    %v646 = vadd.f32 %v469, %v340
    %v647 = vadd.f32 %v473, %v341
    %v648 = vadd.f32 %v477, %v342
    %v649 = vadd.f32 %v481, %v343
    %v650 = vadd.f32 %v485, %v344
    %v651 = vadd.f32 %v489, %v345
    %v652 = vadd.f32 %v493, %v346
    %v653 = vadd.f32 %v497, %v347
    %v654 = vadd.f32 %v501, %v348
    %v655 = vadd.f32 %v505, %v349
    %v656 = vadd.f32 %v509, %v350
    %v657 = vadd.f32 %v513, %v351
    %v658 = vadd.f32 %v517, %v352
    %v659 = vadd.f32 %v521, %v353
    %v660 = vadd.f32 %v525, %v354
    %v661 = vadd.f32 %v529, %v355
    %v662 = vadd.f32 %v533, %v356
    %v663 = vadd.f32 %v537, %v357
    %v664 = vadd.f32 %v469, %v358
    %v665 = vadd.f32 %v473, %v359
    %v666 = vadd.f32 %v477, %v360
    %v667 = vadd.f32 %v481, %v361
    %v668 = vadd.f32 %v485, %v362
    %v669 = vadd.f32 %v489, %v363
    %v670 = vadd.f32 %v493, %v364
    %v671 = vadd.f32 %v497, %v365
    %v672 = vadd.f32 %v501, %v366
    %v673 = vadd.f32 %v505, %v367
    %v674 = vadd.f32 %v509, %v368
    %v675 = vadd.f32 %v513, %v369
    %v676 = vadd.f32 %v517, %v370
    %v677 = vadd.f32 %v521, %v371
    %v678 = vadd.f32 %v525, %v372
    %v679 = vadd.f32 %v529, %v373
    %v680 = vadd.f32 %v533, %v374
    %v681 = vadd.f32 %v537, %v375
    %682 = vst [vmem:[#allocation2] sm:$0xff] %v538
    %683 = vst [vmem:[#allocation2 + $0x8] sm:$0xff] %v539
    %684 = vst [vmem:[#allocation2 + $0x10] sm:$0xff] %v540
    %685 = vst [vmem:[#allocation2 + $0x18] sm:$0xff] %v541
    %686 = vst [vmem:[#allocation2 + $0x20] sm:$0xff] %v542
    %687 = vst [vmem:[#allocation2 + $0x28] sm:$0xff] %v543
    %688 = vst [vmem:[#allocation2 + $0x30] sm:$0xff] %v544
    %689 = vst [vmem:[#allocation2 + $0x38] sm:$0xff] %v545
    %690 = vst [vmem:[#allocation2 + $0x40] sm:$0xff] %v546
    %691 = vst [vmem:[#allocation2 + $0x48] sm:$0xff] %v547
    %692 = vst [vmem:[#allocation2 + $0x50] sm:$0xff] %v548
    %693 = vst [vmem:[#allocation2 + $0x58] sm:$0xff] %v549
    %694 = vst [vmem:[#allocation2 + $0x60] sm:$0xff] %v550
    %695 = vst [vmem:[#allocation2 + $0x68] sm:$0xff] %v551
    %696 = vst [vmem:[#allocation2 + $0x70] sm:$0xff] %v552
    %697 = vst [vmem:[#allocation2 + $0x78] sm:$0xff] %v553
    %698 = vst [vmem:[#allocation2 + $0x80] sm:$0xff] %v554
    %699 = vst [vmem:[#allocation2 + $0x88] sm:$0xff] %v555
    %700 = vst [vmem:[#allocation2 + $0x90] sm:$0xff] %v556
    %701 = vst [vmem:[#allocation2 + $0x98] sm:$0xff] %v557
    %702 = vst [vmem:[#allocation2 + $0xa0] sm:$0xff] %v558
    %703 = vst [vmem:[#allocation2 + $0xa8] sm:$0xff] %v559
    %704 = vst [vmem:[#allocation2 + $0xb0] sm:$0xff] %v560
    %705 = vst [vmem:[#allocation2 + $0xb8] sm:$0xff] %v561
    %706 = vst [vmem:[#allocation2 + $0xc0] sm:$0xff] %v562
    %707 = vst [vmem:[#allocation2 + $0xc8] sm:$0xff] %v563
    %708 = vst [vmem:[#allocation2 + $0xd0] sm:$0xff] %v564
    %709 = vst [vmem:[#allocation2 + $0xd8] sm:$0xff] %v565
    %710 = vst [vmem:[#allocation2 + $0xe0] sm:$0xff] %v566
    %711 = vst [vmem:[#allocation2 + $0xe8] sm:$0xff] %v567
    %712 = vst [vmem:[#allocation2 + $0xf0] sm:$0xff] %v568
    %713 = vst [vmem:[#allocation2 + $0xf8] sm:$0xff] %v569
    %714 = vst [vmem:[#allocation2 + $0x100] sm:$0xff] %v570
    %715 = vst [vmem:[#allocation2 + $0x108] sm:$0xff] %v571
    %716 = vst [vmem:[#allocation2 + $0x110] sm:$0xff] %v572
    %717 = vst [vmem:[#allocation2 + $0x118] sm:$0xff] %v573
    %718 = vst [vmem:[#allocation2 + $0x120] sm:$0xff] %v574
    %719 = vst [vmem:[#allocation2 + $0x128] sm:$0xff] %v575
    %720 = vst [vmem:[#allocation2 + $0x130] sm:$0xff] %v576
    %721 = vst [vmem:[#allocation2 + $0x138] sm:$0xff] %v577
    %722 = vst [vmem:[#allocation2 + $0x140] sm:$0xff] %v578
    %723 = vst [vmem:[#allocation2 + $0x148] sm:$0xff] %v579
    %724 = vst [vmem:[#allocation2 + $0x150] sm:$0xff] %v580
    %725 = vst [vmem:[#allocation2 + $0x158] sm:$0xff] %v581
    %726 = vst [vmem:[#allocation2 + $0x160] sm:$0xff] %v582
    %727 = vst [vmem:[#allocation2 + $0x168] sm:$0xff] %v583
    %728 = vst [vmem:[#allocation2 + $0x170] sm:$0xff] %v584
    %729 = vst [vmem:[#allocation2 + $0x178] sm:$0xff] %v585
    %730 = vst [vmem:[#allocation2 + $0x180] sm:$0xff] %v586
    %731 = vst [vmem:[#allocation2 + $0x188] sm:$0xff] %v587
    %732 = vst [vmem:[#allocation2 + $0x190] sm:$0xff] %v588
    %733 = vst [vmem:[#allocation2 + $0x198] sm:$0xff] %v589
    %734 = vst [vmem:[#allocation2 + $0x1a0] sm:$0xff] %v590
    %735 = vst [vmem:[#allocation2 + $0x1a8] sm:$0xff] %v591
    %736 = vst [vmem:[#allocation2 + $0x1b0] sm:$0xff] %v592
    %737 = vst [vmem:[#allocation2 + $0x1b8] sm:$0xff] %v593
    %738 = vst [vmem:[#allocation2 + $0x1c0] sm:$0xff] %v594
    %739 = vst [vmem:[#allocation2 + $0x1c8] sm:$0xff] %v595
    %740 = vst [vmem:[#allocation2 + $0x1d0] sm:$0xff] %v596
    %741 = vst [vmem:[#allocation2 + $0x1d8] sm:$0xff] %v597
    %742 = vst [vmem:[#allocation2 + $0x1e0] sm:$0xff] %v598
    %743 = vst [vmem:[#allocation2 + $0x1e8] sm:$0xff] %v599
    %744 = vst [vmem:[#allocation2 + $0x1f0] sm:$0xff] %v600
    %745 = vst [vmem:[#allocation2 + $0x1f8] sm:$0xff] %v601
    %746 = vst [vmem:[#allocation2 + $0x200] sm:$0xff] %v602
    %747 = vst [vmem:[#allocation2 + $0x208] sm:$0xff] %v603
    %748 = vst [vmem:[#allocation2 + $0x210] sm:$0xff] %v604
    %749 = vst [vmem:[#allocation2 + $0x218] sm:$0xff] %v605
    %750 = vst [vmem:[#allocation2 + $0x220] sm:$0xff] %v606
    %751 = vst [vmem:[#allocation2 + $0x228] sm:$0xff] %v607
    %752 = vst [vmem:[#allocation2 + $0x230] sm:$0xff] %v608
    %753 = vst [vmem:[#allocation2 + $0x238] sm:$0xff] %v609
    %754 = vst [vmem:[#allocation2 + $0x240] sm:$0xff] %v610
    %755 = vst [vmem:[#allocation2 + $0x248] sm:$0xff] %v611
    %756 = vst [vmem:[#allocation2 + $0x250] sm:$0xff] %v612
    %757 = vst [vmem:[#allocation2 + $0x258] sm:$0xff] %v613
    %758 = vst [vmem:[#allocation2 + $0x260] sm:$0xff] %v614
    %759 = vst [vmem:[#allocation2 + $0x268] sm:$0xff] %v615
    %760 = vst [vmem:[#allocation2 + $0x270] sm:$0xff] %v616
    %761 = vst [vmem:[#allocation2 + $0x278] sm:$0xff] %v617
    %762 = vst [vmem:[#allocation2 + $0x280] sm:$0xff] %v618
    %763 = vst [vmem:[#allocation2 + $0x288] sm:$0xff] %v619
    %764 = vst [vmem:[#allocation2 + $0x290] sm:$0xff] %v620
    %765 = vst [vmem:[#allocation2 + $0x298] sm:$0xff] %v621
    %766 = vst [vmem:[#allocation2 + $0x2a0] sm:$0xff] %v622
    %767 = vst [vmem:[#allocation2 + $0x2a8] sm:$0xff] %v623
    %768 = vst [vmem:[#allocation2 + $0x2b0] sm:$0xff] %v624
    %769 = vst [vmem:[#allocation2 + $0x2b8] sm:$0xff] %v625
    %770 = vst [vmem:[#allocation2 + $0x2c0] sm:$0xff] %v626
    %771 = vst [vmem:[#allocation2 + $0x2c8] sm:$0xff] %v627
    %772 = vst [vmem:[#allocation2 + $0x2d0] sm:$0xff] %v628
    %773 = vst [vmem:[#allocation2 + $0x2d8] sm:$0xff] %v629
    %774 = vst [vmem:[#allocation2 + $0x2e0] sm:$0xff] %v630
    %775 = vst [vmem:[#allocation2 + $0x2e8] sm:$0xff] %v631
    %776 = vst [vmem:[#allocation2 + $0x2f0] sm:$0xff] %v632
    %777 = vst [vmem:[#allocation2 + $0x2f8] sm:$0xff] %v633
    %778 = vst [vmem:[#allocation2 + $0x300] sm:$0xff] %v634
    %779 = vst [vmem:[#allocation2 + $0x308] sm:$0xff] %v635
    %780 = vst [vmem:[#allocation2 + $0x310] sm:$0xff] %v636
    %781 = vst [vmem:[#allocation2 + $0x318] sm:$0xff] %v637
    %782 = vst [vmem:[#allocation2 + $0x320] sm:$0xff] %v638
    %783 = vst [vmem:[#allocation2 + $0x328] sm:$0xff] %v639
    %784 = vst [vmem:[#allocation2 + $0x330] sm:$0xff] %v640
    %785 = vst [vmem:[#allocation2 + $0x338] sm:$0xff] %v641
    %786 = vst [vmem:[#allocation2 + $0x340] sm:$0xff] %v642
    %787 = vst [vmem:[#allocation2 + $0x348] sm:$0xff] %v643
    %788 = vst [vmem:[#allocation2 + $0x350] sm:$0xff] %v644
    %789 = vst [vmem:[#allocation2 + $0x358] sm:$0xff] %v645
    %790 = vst [vmem:[#allocation2 + $0x360] sm:$0xff] %v646
    %791 = vst [vmem:[#allocation2 + $0x368] sm:$0xff] %v647
    %792 = vst [vmem:[#allocation2 + $0x370] sm:$0xff] %v648
    %793 = vst [vmem:[#allocation2 + $0x378] sm:$0xff] %v649
    %794 = vst [vmem:[#allocation2 + $0x380] sm:$0xff] %v650
    %795 = vst [vmem:[#allocation2 + $0x388] sm:$0xff] %v651
    %796 = vst [vmem:[#allocation2 + $0x390] sm:$0xff] %v652
    %797 = vst [vmem:[#allocation2 + $0x398] sm:$0xff] %v653
    %798 = vst [vmem:[#allocation2 + $0x3a0] sm:$0xff] %v654
    %799 = vst [vmem:[#allocation2 + $0x3a8] sm:$0xff] %v655
    %800 = vst [vmem:[#allocation2 + $0x3b0] sm:$0xff] %v656
    %801 = vst [vmem:[#allocation2 + $0x3b8] sm:$0xff] %v657
    %802 = vst [vmem:[#allocation2 + $0x3c0] sm:$0xff] %v658
    %803 = vst [vmem:[#allocation2 + $0x3c8] sm:$0xff] %v659
    %804 = vst [vmem:[#allocation2 + $0x3d0] sm:$0xff] %v660
    %805 = vst [vmem:[#allocation2 + $0x3d8] sm:$0xff] %v661
    %806 = vst [vmem:[#allocation2 + $0x3e0] sm:$0xff] %v662
    %807 = vst [vmem:[#allocation2 + $0x3e8] sm:$0xff] %v663
    %808 = vst [vmem:[#allocation2 + $0x3f0] sm:$0xff] %v664
    %809 = vst [vmem:[#allocation2 + $0x3f8] sm:$0xff] %v665
    %810 = vst [vmem:[#allocation2 + $0x400] sm:$0xff] %v666
    %811 = vst [vmem:[#allocation2 + $0x408] sm:$0xff] %v667
    %812 = vst [vmem:[#allocation2 + $0x410] sm:$0xff] %v668
    %813 = vst [vmem:[#allocation2 + $0x418] sm:$0xff] %v669
    %814 = vst [vmem:[#allocation2 + $0x420] sm:$0xff] %v670
    %815 = vst [vmem:[#allocation2 + $0x428] sm:$0xff] %v671
    %816 = vst [vmem:[#allocation2 + $0x430] sm:$0xff] %v672
    %817 = vst [vmem:[#allocation2 + $0x438] sm:$0xff] %v673
    %818 = vst [vmem:[#allocation2 + $0x440] sm:$0xff] %v674
    %819 = vst [vmem:[#allocation2 + $0x448] sm:$0xff] %v675
    %820 = vst [vmem:[#allocation2 + $0x450] sm:$0xff] %v676
    %821 = vst [vmem:[#allocation2 + $0x458] sm:$0xff] %v677
    %822 = vst [vmem:[#allocation2 + $0x460] sm:$0xff] %v678
    %823 = vst [vmem:[#allocation2 + $0x468] sm:$0xff] %v679
    %824 = vst [vmem:[#allocation2 + $0x470] sm:$0xff] %v680
    %825 = vst [vmem:[#allocation2 + $0x478] sm:$0xff] %v681
    // Predicated region
    $region10: #{tpu_custom_call.1} parent=1 // pred_check
      _
    $region11: #{tpu_custom_call.1} parent=1 // pred_check_branch
      %827 = sbr.rel (0) target = $region13
    $region12: #{tpu_custom_call.1} parent=1 // pred_region
      %s829 = ssub.s32 18432, 18432
      %830 = vsyncadd [#allocation3], %s829
      %s831 = sshll.u32 [#allocation2], 4
      %s832 = int_to_ptr.vmem [resolvable:$true] %s831
      %837 = dma.vmem_to_hbm [thread:$0]  %s832, 18432, %s2, [#allocation3], 2304, 2304, 144
    $region13: #{tpu_custom_call.1} parent=1 // pred_fallthru
      _
    // Predicated region
    $region14: #{tpu_custom_call.1} parent=1 // pred_check
      _
    $region15: #{tpu_custom_call.1} parent=1 // pred_check_branch
      %839 = sbr.rel (0) target = $region17
    $region16: #{tpu_custom_call.1} parent=1 // pred_region
      %840 = dma.done [#allocation3], 18432
    $region17: #{tpu_custom_call.1} parent=1 // pred_fallthru
      _
    %841 = vsyncpa [#allocation3], 1

</llo_original>
